<compile_context>
chip_gen: v5e
topology: v5e:2x2
jax: 0.10.0
libtpu: 0.0.40
codegen_flags: <defaults>
</compile_context>

<pallas_src>
import functools
from typing import Dict, Any, Optional

import jax
import jax.numpy as jnp
from jax.experimental import pallas as pl
from jax.experimental.pallas import tpu as pltpu


def _round_up(x: int, m: int) -> int:
    return (x + m - 1) // m * m


# ----------------------------------------------------------------------------
# Pallas kernel: fused TaskNN forward + BCE loss partials + confidence ("prob")
# ----------------------------------------------------------------------------
def _tasknn_kernel(
    B, L, tile_b,            # static (baked via functools.partial)
    x_ref,                   # (TILE_B, F_p)  bfloat16
    w1_ref,                  # (F_p, H_p)     bfloat16
    b1_ref,                  # (1, H_p)       float32
    w2_ref,                  # (H_p, L_p)     bfloat16
    b2_ref,                  # (1, L_p)       float32
    lab_ref,                 # (TILE_B, L_p)  bfloat16 (zero-padded multi-hot)
    y_ref,                   # out: (TILE_B, L_p) float32  sigmoid probabilities
    stats_ref,               # out: (TILE_B, 128) float32  lane0=prob, lane1=row BCE sum
):
    i = pl.program_id(0)

    # TaskNN MLP (inference_module forward): bf16 MXU inputs, f32 accumulation.
    h = jnp.dot(x_ref[...], w1_ref[...],
                preferred_element_type=jnp.float32) + b1_ref[...]
    h = jnp.maximum(h, 0.0)                                   # ReLU (f32, VPU)
    logits = jnp.dot(h.astype(jnp.bfloat16), w2_ref[...],
                     preferred_element_type=jnp.float32) + b2_ref[...]

    # Single shared transcendental: e = exp(-|z|) feeds both sigmoid and BCE.
    e = jnp.exp(-jnp.abs(logits))
    one_plus_e = 1.0 + e
    inv = pl.reciprocal(one_plus_e, approx=True)              # EUP slot
    y_pred = jnp.where(logits >= 0.0, inv, e * inv)           # sigmoid(logits)
    y_ref[...] = y_pred

    labels = lab_ref[...].astype(jnp.float32)                 # exact for {0,1}
    tb, lp = logits.shape
    col = jax.lax.broadcasted_iota(jnp.int32, (tb, lp), 1)
    row = jax.lax.broadcasted_iota(jnp.int32, (tb, lp), 0) + i * tile_b
    col_valid = col < L
    valid = col_valid & (row < B)

    # Numerically-stable BCE-with-logits:  max(z,0) - z*y + log(1 + exp(-|z|)).
    bce = jnp.maximum(logits, 0.0) - logits * labels + jnp.log(one_plus_e)
    row_bce = jnp.sum(jnp.where(valid, bce, 0.0), axis=-1, keepdims=True)   # (tb, 1)

    # buffer['prob'] = y_pred.max(dim=-1)[0].mean(dim=-1); samples dim S == 1 so
    # the mean is a no-op. Mask padded label columns (sigmoid(0)=0.5 pollution).
    prob = jnp.max(jnp.where(col_valid, y_pred, 0.0), axis=-1, keepdims=True)

    lane = jax.lax.broadcasted_iota(jnp.int32, (tb, 128), 1)
    stats_ref[...] = (jnp.where(lane == 0, prob, 0.0)
                      + jnp.where(lane == 1, row_bce, 0.0))


@jax.jit
def _tasknn_forward(x, labels, w1, b1, w2, b2):
    B, F = x.shape
    L = labels.shape[1]
    F_p, H_p = w1.shape
    L_p = w2.shape[1]

    # Batch tile: 256 rows for real batches (MXU-friendly), single 8-aligned
    # block for tiny ones. Footprint is well under the 32 MiB scoped VMEM.
    tile_b = 256 if B >= 256 else _round_up(max(B, 1), 8)
    B_p = _round_up(B, tile_b)

    # Cast batch-proportional inputs to bf16 in the wrapper: halves their HBM
    # DMA bytes; x was going to the MXU as bf16 anyway, labels are exact {0,1}.
    x_p = jnp.pad(x.astype(jnp.bfloat16), ((0, B_p - B), (0, F_p - F)))
    lab_p = jnp.pad(labels.astype(jnp.bfloat16), ((0, B_p - B), (0, L_p - L)))

    kernel = functools.partial(_tasknn_kernel, B, L, tile_b)
    y_p, stats = pl.pallas_call(
        kernel,
        grid_spec=pltpu.PrefetchScalarGridSpec(
            num_scalar_prefetch=0,
            grid=(B_p // tile_b,),
            in_specs=[
                pl.BlockSpec((tile_b, F_p), lambda i: (i, 0)),   # x tile
                pl.BlockSpec((F_p, H_p), lambda i: (0, 0)),      # w1 (resident)
                pl.BlockSpec((1, H_p), lambda i: (0, 0)),        # b1
                pl.BlockSpec((H_p, L_p), lambda i: (0, 0)),      # w2 (resident)
                pl.BlockSpec((1, L_p), lambda i: (0, 0)),        # b2
                pl.BlockSpec((tile_b, L_p), lambda i: (i, 0)),   # labels tile
            ],
            out_specs=[
                pl.BlockSpec((tile_b, L_p), lambda i: (i, 0)),   # y_pred (lane-dense)
                pl.BlockSpec((tile_b, 128), lambda i: (i, 0)),   # packed prob/loss
            ],
        ),
        out_shape=(
            jax.ShapeDtypeStruct((B_p, L_p), jnp.float32),
            jax.ShapeDtypeStruct((B_p, 128), jnp.float32),
        ),
        compiler_params=pltpu.CompilerParams(
            dimension_semantics=("parallel",),
            vmem_limit_bytes=32 * 1024 * 1024,
        ),
    )(x_p, w1, b1, w2, b2, lab_p)

    y_pred = y_p[:B, :L]
    prob = stats[:B, 0]
    loss = jnp.sum(stats[:B, 1]) / (B * L)     # mean BCE over real elements only
    return y_pred, loss, prob


# ----------------------------------------------------------------------------
# Pallas kernel: compute_score(x, y) = score_nn(x, y)
# score_nn(x, y) = sum_L y * (relu(x @ Ws1 + bs1) @ Ws2 + bs2)   (per example)
# ----------------------------------------------------------------------------
def _score_kernel(L, x_ref, y_in_ref, ws1_ref, bs1_ref, ws2_ref, bs2_ref, score_ref):
    h = jnp.maximum(
        jnp.dot(x_ref[...], ws1_ref[...],
                preferred_element_type=jnp.float32) + bs1_ref[...],
        0.0,
    )
    e = jnp.dot(h.astype(jnp.bfloat16), ws2_ref[...],
                preferred_element_type=jnp.float32) + bs2_ref[...]
    y = y_in_ref[...].astype(jnp.float32)
    tb, lp = e.shape
    col = jax.lax.broadcasted_iota(jnp.int32, (tb, lp), 1)
    s = jnp.sum(jnp.where(col < L, y * e, 0.0), axis=-1, keepdims=True)   # (tb, 1)
    lane = jax.lax.broadcasted_iota(jnp.int32, (tb, 128), 1)
    score_ref[...] = jnp.where(lane == 0, s, 0.0)


@jax.jit
def _compute_score(x, y, ws1, bs1, ws2, bs2):
    B, F = x.shape
    L = y.shape[1]
    F_p, H_p = ws1.shape
    L_p = ws2.shape[1]

    tile_b = 256 if B >= 256 else _round_up(max(B, 1), 8)
    B_p = _round_up(B, tile_b)

    x_p = jnp.pad(x.astype(jnp.bfloat16), ((0, B_p - B), (0, F_p - F)))
    y_p = jnp.pad(y.astype(jnp.bfloat16), ((0, B_p - B), (0, L_p - L)))

    kernel = functools.partial(_score_kernel, L)
    score = pl.pallas_call(
        kernel,
        grid_spec=pltpu.PrefetchScalarGridSpec(
            num_scalar_prefetch=0,
            grid=(B_p // tile_b,),
            in_specs=[
                pl.BlockSpec((tile_b, F_p), lambda i: (i, 0)),
                pl.BlockSpec((tile_b, L_p), lambda i: (i, 0)),
                pl.BlockSpec((F_p, H_p), lambda i: (0, 0)),
                pl.BlockSpec((1, H_p), lambda i: (0, 0)),
                pl.BlockSpec((H_p, L_p), lambda i: (0, 0)),
                pl.BlockSpec((1, L_p), lambda i: (0, 0)),
            ],
            out_specs=pl.BlockSpec((tile_b, 128), lambda i: (i, 0)),
        ),
        out_shape=jax.ShapeDtypeStruct((B_p, 128), jnp.float32),
        compiler_params=pltpu.CompilerParams(
            dimension_semantics=("parallel",),
            vmem_limit_bytes=32 * 1024 * 1024,
        ),
    )(x_p, y_p, ws1, bs1, ws2, bs2)
    return score[:B, 0]


# ----------------------------------------------------------------------------
# Thin Python wrapper mirroring ScoreBasedLearningModel's public forward API.
# Only numeric compute is done inside Pallas kernels; this class is glue.
# ----------------------------------------------------------------------------
class ScoreBasedLearningModelPallas:
    def __init__(self, in_features: int = 32, hidden: int = 32, num_labels: int = 16):
        self.F, self.H, self.L = in_features, hidden, num_labels
        F_p = _round_up(in_features, 128)
        H_p = _round_up(hidden, 128)
        L_p = _round_up(num_labels, 128)

        k = jax.random.PRNGKey(0)
        k1, k2, k3, k4 = jax.random.split(k, 4)
        s1 = 1.0 / jnp.sqrt(in_features)
        s2 = 1.0 / jnp.sqrt(hidden)

        def pad_w(w, r, c):
            return jnp.pad(w, ((0, r - w.shape[0]), (0, c - w.shape[1])))

        w1 = jax.random.normal(k1, (in_features, hidden), jnp.float32) * s1
        w2 = jax.random.normal(k2, (hidden, num_labels), jnp.float32) * s2
        ws1 = jax.random.normal(k3, (in_features, hidden), jnp.float32) * s1
        ws2 = jax.random.normal(k4, (hidden, num_labels), jnp.float32) * s2

        # TaskNN (inference_module / sampler) parameters: bf16 weights (MXU path),
        # f32 biases, all pre-padded to lane-aligned shapes (zero padding).
        self.w1 = pad_w(w1, F_p, H_p).astype(jnp.bfloat16)
        self.b1 = jnp.zeros((1, H_p), jnp.float32)
        self.w2 = pad_w(w2, H_p, L_p).astype(jnp.bfloat16)
        self.b2 = jnp.zeros((1, L_p), jnp.float32)
        # ScoreNN parameters (for compute_score mode).
        self.ws1 = pad_w(ws1, F_p, H_p).astype(jnp.bfloat16)
        self.bs1 = jnp.zeros((1, H_p), jnp.float32)
        self.ws2 = pad_w(ws2, H_p, L_p).astype(jnp.bfloat16)
        self.bs2 = jnp.zeros((1, L_p), jnp.float32)

    # convert_to_one_hot / unsqueeze_labels / squeeze_y are identities here
    # (multi-label task, samples dim S == 1), matching the base-class defaults.

    def forward(self, x, labels, mode: Optional[str] = "update_task_nn") -> Dict[str, Any]:
        buffer: Dict[str, Any] = {"task": ["labeled"]}
        if mode in ("update_task_nn", None):
            y_pred, loss, prob = _tasknn_forward(
                x, labels, self.w1, self.b1, self.w2, self.b2
            )
            buffer["prob"] = prob
            return {"loss": loss, "y_pred": y_pred, "buffer": buffer}
        elif mode == "compute_score":
            score = _compute_score(
                x, labels, self.ws1, self.bs1, self.ws2, self.bs2
            )
            return {"score": score}
        else:
            # TODO(synk): forward_on_scorenn requires the injected Loss/Sampler
            # objects (NCE / DVN losses, pseudo-labeling); not instantiated here.
            raise ValueError(mode)


if __name__ == "__main__":
    B, F, H, L = 2, 32, 32, 16
    key = jax.random.PRNGKey(0)
    kx, kl = jax.random.split(key)
    x = jax.random.normal(kx, (B, F), dtype=jnp.float32)
    labels = (jax.random.uniform(kl, (B, L)) > 0.5).astype(jnp.float32)

    model = ScoreBasedLearningModelPallas(in_features=F, hidden=H, num_labels=L)

    # Default forward path (ModelMode.UPDATE_TASK_NN).
    results = model.forward(x, labels)
    jax.block_until_ready(results["loss"])
    jax.block_until_ready(results["y_pred"])
    jax.block_until_ready(results["buffer"]["prob"])

    # compute_score path (ModelMode.COMPUTE_SCORE).
    score_results = model.forward(x, labels, mode="compute_score")
    jax.block_until_ready(score_results["score"])

    assert results["y_pred"].shape == (B, L)
    assert results["buffer"]["prob"].shape == (B,)
    assert results["loss"].shape == ()
    assert score_results["score"].shape == (B,)
    assert bool(jnp.isfinite(results["loss"]))
    assert bool(jnp.all(jnp.isfinite(results["y_pred"])))
    assert bool(jnp.all(jnp.isfinite(score_results["score"])))

    print("KERNEL_OK")
</pallas_src>

<mosaic_0001>
module attributes {stable_mosaic.version = 11 : i64} {
  func.func @_tasknn_kernel(%arg0: i32, %arg1: memref<8x128xbf16, #tpu.memory_space<vmem>>, %arg2: memref<128x128xbf16, #tpu.memory_space<vmem>>, %arg3: memref<1x128xf32, #tpu.memory_space<vmem>>, %arg4: memref<128x128xbf16, #tpu.memory_space<vmem>>, %arg5: memref<1x128xf32, #tpu.memory_space<vmem>>, %arg6: memref<8x128xbf16, #tpu.memory_space<vmem>>, %arg7: memref<8x128xf32, #tpu.memory_space<vmem>>, %arg8: memref<8x128xf32, #tpu.memory_space<vmem>>) attributes {dimension_semantics = [#tpu.dimension_semantics<parallel>], iteration_bounds = array<i64: 1>, scalar_prefetch = 0 : i64, scratch_operands = 0 : i64, tpu.core_type = #tpu.core_type<tc>, window_params = [{transform_indices = @transform_0, window_bounds = array<i64: 8, 128>}, {pipeline_mode = #tpu.pipeline_mode<synchronous>, transform_indices = @transform_1, window_bounds = array<i64: 128, 128>}, {pipeline_mode = #tpu.pipeline_mode<synchronous>, transform_indices = @transform_2, window_bounds = array<i64: 1, 128>}, {pipeline_mode = #tpu.pipeline_mode<synchronous>, transform_indices = @transform_3, window_bounds = array<i64: 128, 128>}, {pipeline_mode = #tpu.pipeline_mode<synchronous>, transform_indices = @transform_4, window_bounds = array<i64: 1, 128>}, {transform_indices = @transform_5, window_bounds = array<i64: 8, 128>}, {transform_indices = @transform_6, window_bounds = array<i64: 8, 128>}, {transform_indices = @transform_7, window_bounds = array<i64: 8, 128>}]} {
    %c0 = arith.constant 0 : index
    %c0_0 = arith.constant 0 : index
    %0 = vector.load %arg1[%c0, %c0_0] : memref<8x128xbf16, #tpu.memory_space<vmem>>, vector<8x128xbf16>
    %c0_1 = arith.constant 0 : index
    %c0_2 = arith.constant 0 : index
    %1 = vector.load %arg2[%c0_1, %c0_2] : memref<128x128xbf16, #tpu.memory_space<vmem>>, vector<128x128xbf16>
    %cst = arith.constant dense<0.000000e+00> : vector<8x128xf32>
    %2 = tpu.matmul %0, %1, %cst {dimension_numbers = #tpu.dot_dimension_numbers<[1], [0], [0], [1], [0, 0, 1, 1], [], []>} : vector<8x128xbf16>, vector<128x128xbf16>, vector<8x128xf32> -> vector<8x128xf32>
    %c0_3 = arith.constant 0 : index
    %c0_4 = arith.constant 0 : index
    %3 = vector.load %arg3[%c0_3, %c0_4] : memref<1x128xf32, #tpu.memory_space<vmem>>, vector<1x128xf32>
    %4 = vector.broadcast %3 : vector<1x128xf32> to vector<8x128xf32>
    %5 = arith.addf %2, %4 : vector<8x128xf32>
    %cst_5 = arith.constant 0.000000e+00 : f32
    %6 = vector.broadcast %cst_5 : f32 to vector<8x128xf32>
    %7 = arith.maximumf %5, %6 : vector<8x128xf32>
    %8 = arith.truncf %7 : vector<8x128xf32> to vector<8x128xbf16>
    %c0_6 = arith.constant 0 : index
    %c0_7 = arith.constant 0 : index
    %9 = vector.load %arg4[%c0_6, %c0_7] : memref<128x128xbf16, #tpu.memory_space<vmem>>, vector<128x128xbf16>
    %cst_8 = arith.constant dense<0.000000e+00> : vector<8x128xf32>
    %10 = tpu.matmul %8, %9, %cst_8 {dimension_numbers = #tpu.dot_dimension_numbers<[1], [0], [0], [1], [0, 0, 1, 1], [], []>} : vector<8x128xbf16>, vector<128x128xbf16>, vector<8x128xf32> -> vector<8x128xf32>
    %c0_9 = arith.constant 0 : index
    %c0_10 = arith.constant 0 : index
    %11 = vector.load %arg5[%c0_9, %c0_10] : memref<1x128xf32, #tpu.memory_space<vmem>>, vector<1x128xf32>
    %12 = vector.broadcast %11 : vector<1x128xf32> to vector<8x128xf32>
    %13 = arith.addf %10, %12 : vector<8x128xf32>
    %14 = math.absf %13 : vector<8x128xf32>
    %cst_11 = arith.constant 0.000000e+00 : f32
    %15 = vector.broadcast %cst_11 : f32 to vector<8x128xf32>
    %16 = arith.subf %15, %14 : vector<8x128xf32>
    %17 = math.exp %16 : vector<8x128xf32>
    %cst_12 = arith.constant 1.000000e+00 : f32
    %18 = vector.broadcast %cst_12 : f32 to vector<8x128xf32>
    %19 = arith.addf %18, %17 : vector<8x128xf32>
    %20 = tpu.reciprocal %19 {approx = true} : vector<8x128xf32> -> vector<8x128xf32>
    %cst_13 = arith.constant 0.000000e+00 : f32
    %21 = vector.broadcast %cst_13 : f32 to vector<8x128xf32>
    %22 = arith.cmpf oge, %13, %21 : vector<8x128xf32>
    %23 = arith.mulf %17, %20 : vector<8x128xf32>
    %24 = arith.select %22, %20, %23 : vector<8x128xi1>, vector<8x128xf32>
    %c0_14 = arith.constant 0 : index
    %c0_15 = arith.constant 0 : index
    %25 = vector.load %arg7[%c0_14, %c0_15] : memref<8x128xf32, #tpu.memory_space<vmem>>, vector<8x128xf32>
    tpu.vector_store %arg7[%c0_14, %c0_15], %24 {strides = array<i32>} : memref<8x128xf32, #tpu.memory_space<vmem>>, vector<8x128xf32>,
    %c0_16 = arith.constant 0 : index
    %c0_17 = arith.constant 0 : index
    %26 = vector.load %arg6[%c0_16, %c0_17] : memref<8x128xbf16, #tpu.memory_space<vmem>>, vector<8x128xbf16>
    %27 = arith.extf %26 : vector<8x128xbf16> to vector<8x128xf32>
    %28 = tpu.iota {dimensions = array<i32: 1>} : vector<8x128xi32>
    %29 = tpu.iota {dimensions = array<i32: 0>} : vector<8x128xi32>
    %c8_i32 = arith.constant 8 : i32
    %30 = arith.muli %arg0, %c8_i32 : i32
    %31 = vector.broadcast %30 : i32 to vector<8x128xi32>
    %32 = arith.addi %29, %31 : vector<8x128xi32>
    %c16_i32 = arith.constant 16 : i32
    %33 = vector.broadcast %c16_i32 : i32 to vector<8x128xi32>
    %34 = arith.cmpi slt, %28, %33 : vector<8x128xi32>
    %c2_i32 = arith.constant 2 : i32
    %35 = vector.broadcast %c2_i32 : i32 to vector<8x128xi32>
    %36 = arith.cmpi slt, %32, %35 : vector<8x128xi32>
    %37 = arith.andi %34, %36 : vector<8x128xi1>
    %cst_18 = arith.constant 0.000000e+00 : f32
    %38 = vector.broadcast %cst_18 : f32 to vector<8x128xf32>
    %39 = arith.maximumf %13, %38 : vector<8x128xf32>
    %40 = arith.mulf %13, %27 : vector<8x128xf32>
    %41 = arith.subf %39, %40 : vector<8x128xf32>
    %42 = math.log %19 : vector<8x128xf32>
    %43 = arith.addf %41, %42 : vector<8x128xf32>
    %cst_19 = arith.constant 0.000000e+00 : f32
    %44 = vector.broadcast %cst_19 : f32 to vector<8x128xf32>
    %45 = arith.select %37, %43, %44 : vector<8x128xi1>, vector<8x128xf32>
    %cst_20 = arith.constant dense<0.000000e+00> : vector<8xf32>
    %46 = vector.multi_reduction <add>, %45, %cst_20 [1] : vector<8x128xf32> to vector<8xf32>
    %47 = vector.shape_cast %46 : vector<8xf32> to vector<8x1xf32>
    %cst_21 = arith.constant 0.000000e+00 : f32
    %48 = vector.broadcast %cst_21 : f32 to vector<8x128xf32>
    %49 = arith.select %34, %24, %48 : vector<8x128xi1>, vector<8x128xf32>
    %cst_22 = arith.constant dense<0xFF800000> : vector<8xf32>
    %50 = vector.multi_reduction <maximumf>, %49, %cst_22 [1] : vector<8x128xf32> to vector<8xf32>
    %51 = vector.shape_cast %50 : vector<8xf32> to vector<8x1xf32>
    %52 = tpu.iota {dimensions = array<i32: 1>} : vector<8x128xi32>
    %c0_i32 = arith.constant 0 : i32
    %53 = vector.broadcast %c0_i32 : i32 to vector<8x128xi32>
    %54 = arith.cmpi eq, %52, %53 : vector<8x128xi32>
    %cst_23 = arith.constant 0.000000e+00 : f32
    %55 = vector.shape_cast %51 : vector<8x1xf32> to vector<8x1xf32>
    %56 = vector.broadcast %55 : vector<8x1xf32> to vector<8x128xf32>
    %57 = vector.broadcast %cst_23 : f32 to vector<8x128xf32>
    %58 = arith.select %54, %56, %57 : vector<8x128xi1>, vector<8x128xf32>
    %c1_i32 = arith.constant 1 : i32
    %59 = vector.broadcast %c1_i32 : i32 to vector<8x128xi32>
    %60 = arith.cmpi eq, %52, %59 : vector<8x128xi32>
    %cst_24 = arith.constant 0.000000e+00 : f32
    %61 = vector.shape_cast %47 : vector<8x1xf32> to vector<8x1xf32>
    %62 = vector.broadcast %61 : vector<8x1xf32> to vector<8x128xf32>
    %63 = vector.broadcast %cst_24 : f32 to vector<8x128xf32>
    %64 = arith.select %60, %62, %63 : vector<8x128xi1>, vector<8x128xf32>
    %65 = arith.addf %58, %64 : vector<8x128xf32>
    %c0_25 = arith.constant 0 : index
    %c0_26 = arith.constant 0 : index
    %66 = vector.load %arg8[%c0_25, %c0_26] : memref<8x128xf32, #tpu.memory_space<vmem>>, vector<8x128xf32>
    tpu.vector_store %arg8[%c0_25, %c0_26], %65 {strides = array<i32>} : memref<8x128xf32, #tpu.memory_space<vmem>>, vector<8x128xf32>,
    return
  }
  func.func @transform_0(%arg0: i32) -> (i32, i32) {
    %c0_i32 = arith.constant 0 : i32
    %c0_i32_0 = arith.constant 0 : i32
    return %arg0, %c0_i32 : i32, i32
  }
  func.func @transform_1(%arg0: i32) -> (i32, i32) {
    %c0_i32 = arith.constant 0 : i32
    %c0_i32_0 = arith.constant 0 : i32
    %c0_i32_1 = arith.constant 0 : i32
    return %c0_i32, %c0_i32_0 : i32, i32
  }
  func.func @transform_2(%arg0: i32) -> (i32, i32) {
    %c0_i32 = arith.constant 0 : i32
    %c0_i32_0 = arith.constant 0 : i32
    %c0_i32_1 = arith.constant 0 : i32
    return %c0_i32, %c0_i32_0 : i32, i32
  }
  func.func @transform_3(%arg0: i32) -> (i32, i32) {
    %c0_i32 = arith.constant 0 : i32
    %c0_i32_0 = arith.constant 0 : i32
    %c0_i32_1 = arith.constant 0 : i32
    return %c0_i32, %c0_i32_0 : i32, i32
  }
  func.func @transform_4(%arg0: i32) -> (i32, i32) {
    %c0_i32 = arith.constant 0 : i32
    %c0_i32_0 = arith.constant 0 : i32
    %c0_i32_1 = arith.constant 0 : i32
    return %c0_i32, %c0_i32_0 : i32, i32
  }
  func.func @transform_5(%arg0: i32) -> (i32, i32) {
    %c0_i32 = arith.constant 0 : i32
    %c0_i32_0 = arith.constant 0 : i32
    return %arg0, %c0_i32 : i32, i32
  }
  func.func @transform_6(%arg0: i32) -> (i32, i32) {
    %c0_i32 = arith.constant 0 : i32
    %c0_i32_0 = arith.constant 0 : i32
    return %arg0, %c0_i32 : i32, i32
  }
  func.func @transform_7(%arg0: i32) -> (i32, i32) {
    %c0_i32 = arith.constant 0 : i32
    %c0_i32_0 = arith.constant 0 : i32
    return %arg0, %c0_i32 : i32, i32
  }
}

</mosaic_0001>

<llo_original>
// kernel: _tasknn_forward.1
$region0: #{_tasknn_forward.1}
  #allocation0 [shape = 'u32[]', space=smem, size = 0x4, offset = 0x4, fixed_abs, tag = 'smem constant byte address 0x4 - core index']
  #allocation1 [shape = 'u32[72,128]{1,0:T(1,128)}', space=vmem, size = 0x9000, scoped, tag = 'internal scratch']
  %s0 = inlined_call_operand.vmem [shape: bf16[8,128], index: 0, kind: input, shape index: {}]
  %s1 = inlined_call_operand.hbm [shape: bf16[128,128], index: 1, kind: input, shape index: {}]
  %s2 = inlined_call_operand.vmem [shape: f32[1,128], index: 2, kind: input, shape index: {}]
  %s3 = inlined_call_operand.hbm [shape: bf16[128,128], index: 3, kind: input, shape index: {}]
  %s4 = inlined_call_operand.vmem [shape: f32[1,128], index: 4, kind: input, shape index: {}]
  %s5 = inlined_call_operand.vmem [shape: bf16[8,128], index: 5, kind: input, shape index: {}]
  %s6 = inlined_call_operand.vmem [shape: f32[8,128], index: 6, kind: output, shape index: {0}]
  %s7 = inlined_call_operand.vmem [shape: f32[8,128], index: 7, kind: output, shape index: {1}]
  %8 = xla_tuple %s6, %s7
  %s9 = sld [smem:[#allocation0]]
  $region50: #{_tasknn_forward.1} parent=0
    _
  %s11 = ssub.s32 1, %s9
  %s12 = scalar_select 0, %s11, %s9
  $region1: #{_tasknn_forward.1} parent=0
    #allocation2 [shape = 'u8[32768]{0}', space=vmem, size = 0x8000, scoped, tag = 'input window, operand 1, single buffered']
    #allocation3 [shape = 's32[1]{0}', space=sflag, size = 0x4, scoped, tag = 'scoped memory for _tasknn_forward.1']
    #allocation4 [shape = 'u8[32768]{0}', space=vmem, size = 0x8000, scoped, tag = 'input window, operand 3, single buffered']
    #allocation5 [shape = 's32[1]{0}', space=sflag, size = 0x4, scoped, tag = 'scoped memory for _tasknn_forward.1']
    %13 = vsyncpa [#allocation3], 0
    %14 = vsyncpa [#allocation5], 0
    // Predicated region
    $region2: #{_tasknn_forward.1} parent=1 // pred_check
      _
    $region3: #{_tasknn_forward.1} parent=1 // pred_check_branch
      %16 = sbr.rel (0) target = $region5
    $region4: #{_tasknn_forward.1} parent=1 // pred_region
      _
    $region5: #{_tasknn_forward.1} parent=1 // pred_fallthru
      _
    // Predicated region
    $region6: #{_tasknn_forward.1} parent=1 // pred_check
      _
    $region7: #{_tasknn_forward.1} parent=1 // pred_check_branch
      %18 = sbr.rel (0) target = $region9
    $region8: #{_tasknn_forward.1} parent=1 // pred_region
      %20 = vsyncadd [#allocation3], 0
      %s21 = sshll.u32 %s1, 4
      %s22 = int_to_ptr.hbm [resolvable:$true] %s21
      %s23 = sshll.u32 [#allocation2], 4
      %s24 = int_to_ptr.vmem [resolvable:$true] %s23
      %29 = dma.hbm_to_vmem [thread:$0]  %s22, 1024, %s24, [#allocation3], 64, 64, 4
    $region9: #{_tasknn_forward.1} parent=1 // pred_fallthru
      _
    // Predicated region
    $region10: #{_tasknn_forward.1} parent=1 // pred_check
      _
    $region11: #{_tasknn_forward.1} parent=1 // pred_check_branch
      %31 = sbr.rel (0) target = $region13
    $region12: #{_tasknn_forward.1} parent=1 // pred_region
      _
    $region13: #{_tasknn_forward.1} parent=1 // pred_fallthru
      _
    // Predicated region
    $region14: #{_tasknn_forward.1} parent=1 // pred_check
      _
    $region15: #{_tasknn_forward.1} parent=1 // pred_check_branch
      %33 = sbr.rel (0) target = $region17
    $region16: #{_tasknn_forward.1} parent=1 // pred_region
      %35 = vsyncadd [#allocation5], 0
      %s36 = sshll.u32 %s3, 4
      %s37 = int_to_ptr.hbm [resolvable:$true] %s36
      %s38 = sshll.u32 [#allocation4], 4
      %s39 = int_to_ptr.vmem [resolvable:$true] %s38
      %44 = dma.hbm_to_vmem [thread:$0]  %s37, 1024, %s39, [#allocation5], 64, 64, 4
    $region17: #{_tasknn_forward.1} parent=1 // pred_fallthru
      _
    // Predicated region
    $region18: #{_tasknn_forward.1} parent=1 // pred_check
      _
    $region19: #{_tasknn_forward.1} parent=1 // pred_check_branch
      %46 = sbr.rel (0) target = $region21
    $region20: #{_tasknn_forward.1} parent=1 // pred_region
      _
    $region21: #{_tasknn_forward.1} parent=1 // pred_fallthru
      _
    // Predicated region
    $region22: #{_tasknn_forward.1} parent=1 // pred_check
      _
    $region23: #{_tasknn_forward.1} parent=1 // pred_check_branch
      %48 = sbr.rel (0) target = $region25
    $region24: #{_tasknn_forward.1} parent=1 // pred_region
      _
    $region25: #{_tasknn_forward.1} parent=1 // pred_fallthru
      _
    // Predicated region
    $region26: #{_tasknn_forward.1} parent=1 // pred_check
      _
    $region27: #{_tasknn_forward.1} parent=1 // pred_check_branch
      %50 = sbr.rel (0) target = $region29
    $region28: #{_tasknn_forward.1} parent=1 // pred_region
      %52 = dma.done [#allocation3], 1024
    $region29: #{_tasknn_forward.1} parent=1 // pred_fallthru
      _
    // Predicated region
    $region30: #{_tasknn_forward.1} parent=1 // pred_check
      _
    $region31: #{_tasknn_forward.1} parent=1 // pred_check_branch
      %54 = sbr.rel (0) target = $region33
    $region32: #{_tasknn_forward.1} parent=1 // pred_region
      %56 = dma.done [#allocation5], 1024
    $region33: #{_tasknn_forward.1} parent=1 // pred_fallthru
      _
    %v57 = vld [vmem:[%s0] sm:$0xf]
    %v58 = vld [vmem:[#allocation2] sm:$0xf]
    %v59 = vld [vmem:[#allocation2 + $0x4] sm:$0xf]
    %v60 = vld [vmem:[#allocation2 + $0x8] sm:$0xf]
    %v61 = vld [vmem:[#allocation2 + $0xc] sm:$0xf]
    %v62 = vld [vmem:[#allocation2 + $0x10] sm:$0xf]
    %v63 = vld [vmem:[#allocation2 + $0x14] sm:$0xf]
    %v64 = vld [vmem:[#allocation2 + $0x18] sm:$0xf]
    %v65 = vld [vmem:[#allocation2 + $0x1c] sm:$0xf]
    %v66 = vld [vmem:[#allocation2 + $0x20] sm:$0xf]
    %v67 = vld [vmem:[#allocation2 + $0x24] sm:$0xf]
    %v68 = vld [vmem:[#allocation2 + $0x28] sm:$0xf]
    %v69 = vld [vmem:[#allocation2 + $0x2c] sm:$0xf]
    %v70 = vld [vmem:[#allocation2 + $0x30] sm:$0xf]
    %v71 = vld [vmem:[#allocation2 + $0x34] sm:$0xf]
    %v72 = vld [vmem:[#allocation2 + $0x38] sm:$0xf]
    %v73 = vld [vmem:[#allocation2 + $0x3c] sm:$0xf]
    %v74 = vld [vmem:[%s2] sm:$0x1]
    %v76 = vperm.slane %v74, 0
    %v94 = vunpack.c.l.b16 %v58
    %v95 = vunpack.c.l.b16 %v59
    %v96 = vunpack.c.l.b16 %v60
    %v97 = vunpack.c.l.b16 %v61
    %v98 = vunpack.c.l.b16 %v62
    %v99 = vunpack.c.l.b16 %v63
    %v100 = vunpack.c.l.b16 %v64
    %v101 = vunpack.c.l.b16 %v65
    %v102 = vunpack.c.l.b16 %v66
    %v103 = vunpack.c.l.b16 %v67
    %v104 = vunpack.c.l.b16 %v68
    %v105 = vunpack.c.l.b16 %v69
    %v106 = vunpack.c.l.b16 %v70
    %v107 = vunpack.c.l.b16 %v71
    %v108 = vunpack.c.l.b16 %v72
    %v109 = vunpack.c.l.b16 %v73
    %v110 = vpack.c.b16 %v95, %v94
    %v111 = vpack.c.b16 %v97, %v96
    %v112 = vpack.c.b16 %v99, %v98
    %v113 = vpack.c.b16 %v101, %v100
    %v114 = vpack.c.b16 %v103, %v102
    %v115 = vpack.c.b16 %v105, %v104
    %v116 = vpack.c.b16 %v107, %v106
    %v117 = vpack.c.b16 %v109, %v108
    %126 = vmatpush.bf16.msra.mxu0 %v117
    %127 = vmatpush.bf16.msra.mxu0 %v116
    %128 = vmatpush.bf16.msra.mxu0 %v115
    %129 = vmatpush.bf16.msra.mxu0 %v114
    %130 = vmatpush.bf16.msra.mxu0 %v113
    %131 = vmatpush.bf16.msra.mxu0 %v112
    %132 = vmatpush.bf16.msra.mxu0 %v111
    %133 = vmatpush.bf16.msra.mxu0 %v110
    %134 = vmatmul.bf16.gmra.mxu0 %v57
    %v135 = vpop.f32.mrf.mxu0
    %v136 = vadd.f32 %v76, %v135
    %v137 = vpop.f32.mrf.mxu0
    %138 = vdwg.mxu0
    %v139 = vmax.f32 %v136, 0.0
    %v140 = vpack.c.bf16 %v139, %v139
    %v141 = vld [vmem:[#allocation4] sm:$0xf]
    %v142 = vld [vmem:[#allocation4 + $0x4] sm:$0xf]
    %v143 = vld [vmem:[#allocation4 + $0x8] sm:$0xf]
    %v144 = vld [vmem:[#allocation4 + $0xc] sm:$0xf]
    %v145 = vld [vmem:[#allocation4 + $0x10] sm:$0xf]
    %v146 = vld [vmem:[#allocation4 + $0x14] sm:$0xf]
    %v147 = vld [vmem:[#allocation4 + $0x18] sm:$0xf]
    %v148 = vld [vmem:[#allocation4 + $0x1c] sm:$0xf]
    %v149 = vld [vmem:[#allocation4 + $0x20] sm:$0xf]
    %v150 = vld [vmem:[#allocation4 + $0x24] sm:$0xf]
    %v151 = vld [vmem:[#allocation4 + $0x28] sm:$0xf]
    %v152 = vld [vmem:[#allocation4 + $0x2c] sm:$0xf]
    %v153 = vld [vmem:[#allocation4 + $0x30] sm:$0xf]
    %v154 = vld [vmem:[#allocation4 + $0x34] sm:$0xf]
    %v155 = vld [vmem:[#allocation4 + $0x38] sm:$0xf]
    %v156 = vld [vmem:[#allocation4 + $0x3c] sm:$0xf]
    %v157 = vld [vmem:[%s4] sm:$0x1]
    %v159 = vperm.slane %v157, 0
    %v177 = vunpack.c.l.b16 %v141
    %v178 = vunpack.c.l.b16 %v142
    %v179 = vunpack.c.l.b16 %v143
    %v180 = vunpack.c.l.b16 %v144
    %v181 = vunpack.c.l.b16 %v145
    %v182 = vunpack.c.l.b16 %v146
    %v183 = vunpack.c.l.b16 %v147
    %v184 = vunpack.c.l.b16 %v148
    %v185 = vunpack.c.l.b16 %v149
    %v186 = vunpack.c.l.b16 %v150
    %v187 = vunpack.c.l.b16 %v151
    %v188 = vunpack.c.l.b16 %v152
    %v189 = vunpack.c.l.b16 %v153
    %v190 = vunpack.c.l.b16 %v154
    %v191 = vunpack.c.l.b16 %v155
    %v192 = vunpack.c.l.b16 %v156
    %v193 = vpack.c.b16 %v178, %v177
    %v194 = vpack.c.b16 %v180, %v179
    %v195 = vpack.c.b16 %v182, %v181
    %v196 = vpack.c.b16 %v184, %v183
    %v197 = vpack.c.b16 %v186, %v185
    %v198 = vpack.c.b16 %v188, %v187
    %v199 = vpack.c.b16 %v190, %v189
    %v200 = vpack.c.b16 %v192, %v191
    %209 = vmatpush.bf16.msra.mxu0 %v200
    %210 = vmatpush.bf16.msra.mxu0 %v199
    %211 = vmatpush.bf16.msra.mxu0 %v198
    %212 = vmatpush.bf16.msra.mxu0 %v197
    %213 = vmatpush.bf16.msra.mxu0 %v196
    %214 = vmatpush.bf16.msra.mxu0 %v195
    %215 = vmatpush.bf16.msra.mxu0 %v194
    %216 = vmatpush.bf16.msra.mxu0 %v193
    %217 = vmatmul.bf16.gmra.mxu0 %v140
    %v218 = vpop.f32.mrf.mxu0
    %v219 = vadd.f32 %v159, %v218
    %v220 = vpop.f32.mrf.mxu0
    %221 = vdwg.mxu0
    %v222 = vand.u32 2147483647, %v219
    %v223 = vsub.f32 0.0, %v222
    %v224 = vmul.f32 %v223, 1.442695
    %v225 = vpow.pop %v224
    %v226 = vadd.f32 %v225, 1.0
    %v227 = vrcp.pop %v226
    %vm228 = vcmp.ge.f32.partialorder %v219, 0.0
    %v229 = vmul.f32 %v225, %v227
    %v230 = vsel %vm228, %v227, %v229
    %231 = vst [vmem:[%s6] sm:$0xff] %v230
    %v232 = vld [vmem:[%s5] sm:$0xf]
    %v233 = vunpack.c.l.bf16 %v232
    %v234 = vlaneseq
    %v235 = vand.u32 %v234, 127
    %v236 = vlaneseq
    %v237 = vshrl.u32 %v236, 7
    %s238 = smul.u32 0, 8
    %v239 = vstv %s238
    %v240 = vadd.s32 %v237, %v239
    %vm241 = vcmp.lt.s32.totalorder %v235, 16
    %vm242 = vcmp.lt.s32.totalorder %v240, 2
    %vm243 = vmand %vm241, %vm242
    %v244 = vmax.f32 %v219, 0.0
    %v245 = vmul.f32 %v219, %v233
    %v246 = vsub.f32 %v244, %v245
    %v247 = vlog2.pop %v226
    %v248 = vmul.f32 %v247, 0.6931472
    %v249 = vadd.f32 %v246, %v248
    %v250 = vsel %vm243, %v249, 0.0
    %251 = vadd.xlane.f32.xlu0 %v250
    %v252 = vpop.xlane.xlu0 %251
    %v253 = vsel %vm241, %v230, 0.0
    %254 = vmax.xlane.f32.xlu0 %v253
    %v255 = vpop.xlane.xlu0 %254
    %vm256 = vcmp.eq.s32.totalorder %v235, 0
    %v257 = vsel %vm256, %v255, 0.0
    %vm258 = vcmp.eq.s32.totalorder %v235, 1
    %v259 = vsel %vm258, %v252, 0.0
    %v260 = vadd.f32 %v257, %v259
    %261 = vst [vmem:[%s7] sm:$0xff] %v260
    // Predicated region
    $region34: #{_tasknn_forward.1} parent=1 // pred_check
      _
    $region35: #{_tasknn_forward.1} parent=1 // pred_check_branch
      %263 = sbr.rel (0) target = $region37
    $region36: #{_tasknn_forward.1} parent=1 // pred_region
      _
    $region37: #{_tasknn_forward.1} parent=1 // pred_fallthru
      _
    // Predicated region
    $region38: #{_tasknn_forward.1} parent=1 // pred_check
      _
    $region39: #{_tasknn_forward.1} parent=1 // pred_check_branch
      %265 = sbr.rel (0) target = $region41
    $region40: #{_tasknn_forward.1} parent=1 // pred_region
      _
    $region41: #{_tasknn_forward.1} parent=1 // pred_fallthru
      _
    // Predicated region
    $region42: #{_tasknn_forward.1} parent=1 // pred_check
      _
    $region43: #{_tasknn_forward.1} parent=1 // pred_check_branch
      %267 = sbr.rel (0) target = $region45
    $region44: #{_tasknn_forward.1} parent=1 // pred_region
      _
    $region45: #{_tasknn_forward.1} parent=1 // pred_fallthru
      _
    // Predicated region
    $region46: #{_tasknn_forward.1} parent=1 // pred_check
      _
    $region47: #{_tasknn_forward.1} parent=1 // pred_check_branch
      %269 = sbr.rel (0) target = $region49
    $region48: #{_tasknn_forward.1} parent=1 // pred_region
      _
    $region49: #{_tasknn_forward.1} parent=1 // pred_fallthru
      _
    %270 = vsyncpa [#allocation3], 1
    %271 = vsyncpa [#allocation5], 1

</llo_original>
